<compile_context>
chip_gen: v6e
topology: v6e:2x2x1
jax: 0.10.0
libtpu: 0.0.40
codegen_flags: <defaults>
</compile_context>

<pallas_src>
import math
import functools

import jax
import jax.numpy as jnp
from jax import lax
from jax.experimental import pallas as pl
from jax.experimental.pallas import tpu as pltpu


# ---------------------------------------------------------------------------
# Hardware-aware sizing helpers
# ---------------------------------------------------------------------------

def _tpu_vmem_capacity():
    """Physical VMEM per TensorCore; conservative 64 MiB (v7x) if unknown."""
    try:
        info = pltpu.get_tpu_info()
        cap = getattr(info, "vmem_capacity_bytes", None)
        if cap:
            return int(cap)
    except Exception:
        pass
    return 64 * 1024 * 1024


def _default_seq_tile(vmem_cap):
    # 128-MiB-VMEM parts (v5e/v6e): 256-wide tiles amortize the ~0.35us/step
    # overhead and feed v6e's 256-wide MXU.  64-MiB parts (v7x): stay at 128.
    # (v5e users can pass seq_tile=128 explicitly to match its 128-wide MXU.)
    return 256 if vmem_cap >= (96 << 20) else 128


def _tile_and_pad(n, target):
    """Sequence tile: multiple of 8 (sublane), <= target; padded extent."""
    n8 = ((n + 7) // 8) * 8
    tile = min(max(target, 8), n8)
    tile = ((tile + 7) // 8) * 8
    n_pad = ((n + tile - 1) // tile) * tile
    return tile, n_pad


def _clamp_vmem(est, vmem_cap):
    return int(min(int(0.75 * vmem_cap), max(2 * est, 32 * 1024 * 1024)))


def _linear_vmem_bytes(C, N, row_tile, itemsize, vmem_cap):
    f32 = 4
    weights = C * N * itemsize + N * f32            # single-buffered (Buffered(1))
    io = 2 * row_tile * (C + N) * itemsize          # double-buffered in/out tiles
    interm = row_tile * N * f32                     # f32 matmul result before cast
    return _clamp_vmem(weights + io + interm, vmem_cap)


def _flash_vmem_bytes(H, Dh, tq, tk, itemsize, vmem_cap):
    f32 = 4
    C = H * Dh
    lane = 128
    dh_pad = ((Dh + lane - 1) // lane) * lane       # lane padding of (.., Dh) scratch
    io = 2 * (tq * C + 2 * tk * C + tq * C) * itemsize         # q, k, v, out tiles x2
    scratch = H * tq * dh_pad * (itemsize + f32) + 2 * H * tq * lane * f32
    interm = 2 * H * tq * tk * f32 + 2 * H * tk * dh_pad * itemsize  # s, p, k3, v3
    return _clamp_vmem(io + scratch + interm, vmem_cap)


# ---------------------------------------------------------------------------
# Kernels
# ---------------------------------------------------------------------------

def qkv_proj_kernel(x_ref, w_ref, b_ref, q_ref, k_ref, v_ref, *, embed_dim):
    """Fused QKV projection for one row tile: (tr, C) @ (C, 3C) + bias."""
    C = embed_dim
    qkv = jnp.dot(x_ref[...], w_ref[...],
                  preferred_element_type=jnp.float32) + b_ref[...]        # (tr, 3C) f32
    q_ref[...] = qkv[:, :C].astype(q_ref.dtype)          # Q (scale already folded in)
    k_ref[...] = qkv[:, C:2 * C].astype(k_ref.dtype)
    v_ref[...] = qkv[:, 2 * C:].astype(v_ref.dtype)


def out_proj_kernel(a_ref, w_ref, b_ref, o_ref):
    """Output projection for one row tile: (tr, C) @ (C, C) + bias."""
    o_ref[...] = (jnp.dot(a_ref[...], w_ref[...],
                          preferred_element_type=jnp.float32)
                  + b_ref[...]).astype(o_ref.dtype)


def flash_attn_kernel(q_ref, k_ref, v_ref, o_ref,
                      q3_scratch, m_scratch, l_scratch, acc_scratch,
                      *, num_heads, head_dim, seq_len, kv_tile, compute_dtype):
    """One (batch b, q-tile qi, kv-tile ki) online-softmax flash update."""
    H, Dh = num_heads, head_dim
    C = H * Dh
    ki = pl.program_id(2)

    @pl.when(ki == 0)
    def _init():
        q = q_ref[...]                                                    # (tq, C)
        tq = q.shape[0]
        q3_scratch[...] = q.reshape(tq, H, Dh).transpose(1, 0, 2)         # (H, tq, Dh)
        m_scratch[...] = jnp.full(m_scratch.shape, -jnp.inf, m_scratch.dtype)
        l_scratch[...] = jnp.zeros(l_scratch.shape, l_scratch.dtype)
        acc_scratch[...] = jnp.zeros(acc_scratch.shape, acc_scratch.dtype)

    k = k_ref[...]                                                        # (tk, C)
    v = v_ref[...]
    tk = k.shape[0]
    k3 = k.reshape(tk, H, Dh).transpose(1, 0, 2)                          # (H, tk, Dh)
    v3 = v.reshape(tk, H, Dh).transpose(1, 0, 2)

    q3 = q3_scratch[...]                                                  # (H, tq, Dh)

    # Head-batched scores; contraction on the last dim keeps the MXU fed.
    s = jnp.einsum("hqd,hkd->hqk", q3, k3,
                   preferred_element_type=jnp.float32)                    # (H, tq, tk) f32

    if seq_len % kv_tile != 0:
        # Static-only branch: mask padded key positions (sequence padding).
        kpos = ki * kv_tile + lax.broadcasted_iota(jnp.int32, s.shape, 2)
        s = jnp.where(kpos < seq_len, s, -jnp.inf)

    # Online softmax (f32 throughout — correct on all generations incl. v5e).
    m_prev = m_scratch[...]                                               # (H, tq, 1)
    m_new = jnp.maximum(m_prev, jnp.max(s, axis=-1, keepdims=True))
    alpha = jnp.exp(m_prev - m_new)
    p = jnp.exp(s - m_new)                                                # (H, tq, tk)
    l_scratch[...] = alpha * l_scratch[...] + jnp.sum(p, axis=-1, keepdims=True)
    acc_scratch[...] = alpha * acc_scratch[...] + jnp.einsum(
        "hqk,hkd->hqd", p.astype(compute_dtype), v3,
        preferred_element_type=jnp.float32)                               # (H, tq, Dh)
    m_scratch[...] = m_new

    @pl.when(ki == pl.num_programs(2) - 1)
    def _finalize():
        inv_l = pl.reciprocal(l_scratch[...], approx=False)               # (H, tq, 1)
        o_heads = acc_scratch[...] * inv_l                                # (H, tq, Dh)
        tq = o_heads.shape[1]
        # Merge heads to a lane-dense (tq, C) slab; transpose rides the XLU
        # once per q-tile only.
        o_ref[...] = jnp.transpose(o_heads, (1, 0, 2)).reshape(tq, C).astype(o_ref.dtype)


# ---------------------------------------------------------------------------
# Wrappers
# ---------------------------------------------------------------------------

def prepare_params(params, num_heads, compute_dtype=jnp.float32):
    """One-time weight prep: PyTorch (out,in) -> (in,out), QKV fused, scale folded."""
    C = params["wq"].shape[0]
    Dh = C // num_heads
    scale = 1.0 / math.sqrt(Dh)
    wq_t = jnp.asarray(params["wq"]).T.astype(jnp.float32) * scale
    wk_t = jnp.asarray(params["wk"]).T.astype(jnp.float32)
    wv_t = jnp.asarray(params["wv"]).T.astype(jnp.float32)
    w_qkv = jnp.concatenate([wq_t, wk_t, wv_t], axis=1).astype(compute_dtype)  # (C, 3C)
    b_qkv = jnp.concatenate(
        [jnp.asarray(params["bq"]).astype(jnp.float32) * scale,
         jnp.asarray(params["bk"]).astype(jnp.float32),
         jnp.asarray(params["bv"]).astype(jnp.float32)]).reshape(1, 3 * C)
    wo_t = jnp.asarray(params["wo"]).T.astype(compute_dtype)                   # (C, C)
    bo = jnp.asarray(params["bo"]).reshape(1, C).astype(jnp.float32)
    return {"w_qkv": w_qkv, "b_qkv": b_qkv, "wo_t": wo_t, "bo": bo,
            "compute_dtype": compute_dtype}


def _const_weight_spec(shape):
    # Weights / biases never change across the grid: single-buffer them so the
    # pipeline does not hold two copies resident.
    return pl.BlockSpec(shape, lambda b, r: (0, 0), pipeline_mode=pl.Buffered(1))


def _qkv_projection(x, prepared, row_tile, vmem_cap):
    B, T_pad, C = x.shape
    compute_dtype = prepared["compute_dtype"]
    itemsize = jnp.dtype(compute_dtype).itemsize
    out_sds = jax.ShapeDtypeStruct((B, T_pad, C), compute_dtype)
    row_spec = pl.BlockSpec((None, row_tile, C), lambda b, r: (b, r, 0))
    return pl.pallas_call(
        functools.partial(qkv_proj_kernel, embed_dim=C),
        out_shape=(out_sds, out_sds, out_sds),
        grid_spec=pltpu.PrefetchScalarGridSpec(
            num_scalar_prefetch=0,
            grid=(B, T_pad // row_tile),
            in_specs=[row_spec,
                      _const_weight_spec((C, 3 * C)),
                      _const_weight_spec((1, 3 * C))],
            out_specs=(row_spec, row_spec, row_spec)),
        compiler_params=pltpu.CompilerParams(
            dimension_semantics=("parallel", "parallel"),
            vmem_limit_bytes=_linear_vmem_bytes(C, 3 * C, row_tile, itemsize, vmem_cap)),
    )(x, prepared["w_qkv"], prepared["b_qkv"])


def _out_projection(attn, prepared, row_tile, out_dtype, vmem_cap):
    B, T_pad, C = attn.shape
    compute_dtype = prepared["compute_dtype"]
    itemsize = jnp.dtype(compute_dtype).itemsize
    row_spec = pl.BlockSpec((None, row_tile, C), lambda b, r: (b, r, 0))
    return pl.pallas_call(
        out_proj_kernel,
        out_shape=jax.ShapeDtypeStruct((B, T_pad, C), out_dtype),
        grid_spec=pltpu.PrefetchScalarGridSpec(
            num_scalar_prefetch=0,
            grid=(B, T_pad // row_tile),
            in_specs=[row_spec,
                      _const_weight_spec((C, C)),
                      _const_weight_spec((1, C))],
            out_specs=row_spec),
        compiler_params=pltpu.CompilerParams(
            dimension_semantics=("parallel", "parallel"),
            vmem_limit_bytes=_linear_vmem_bytes(C, C, row_tile, itemsize, vmem_cap)),
    )(attn, prepared["wo_t"], prepared["bo"])


def _flash_attention(q, k, v, num_heads, head_dim, seq_len, tile, compute_dtype, vmem_cap):
    B, T_pad, C = q.shape
    itemsize = jnp.dtype(compute_dtype).itemsize
    kernel = functools.partial(
        flash_attn_kernel, num_heads=num_heads, head_dim=head_dim,
        seq_len=seq_len, kv_tile=tile, compute_dtype=compute_dtype)
    q_spec = pl.BlockSpec((None, tile, C), lambda b, qi, ki: (b, qi, 0))
    kv_spec = pl.BlockSpec((None, tile, C), lambda b, qi, ki: (b, ki, 0))
    return pl.pallas_call(
        kernel,
        out_shape=jax.ShapeDtypeStruct((B, T_pad, C), compute_dtype),
        grid_spec=pltpu.PrefetchScalarGridSpec(
            num_scalar_prefetch=0,
            grid=(B, T_pad // tile, T_pad // tile),
            in_specs=[q_spec, kv_spec, kv_spec],
            out_specs=pl.BlockSpec((None, tile, C), lambda b, qi, ki: (b, qi, 0)),
            scratch_shapes=[
                pltpu.VMEM((num_heads, tile, head_dim), compute_dtype),   # q per-head
                pltpu.VMEM((num_heads, tile, 1), jnp.float32),            # running max
                pltpu.VMEM((num_heads, tile, 1), jnp.float32),            # running sum
                pltpu.VMEM((num_heads, tile, head_dim), jnp.float32),     # accumulator
            ]),
        compiler_params=pltpu.CompilerParams(
            dimension_semantics=("parallel", "parallel", "arbitrary"),
            vmem_limit_bytes=_flash_vmem_bytes(num_heads, head_dim, tile, tile,
                                               itemsize, vmem_cap)),
    )(q, k, v)


def multi_head_self_attention(x, prepared, num_heads, *, seq_tile=None):
    """x: (B, T, C).  prepared: output of prepare_params (weights pre-laid-out)."""
    B, T, C = x.shape
    head_dim = C // num_heads
    compute_dtype = prepared["compute_dtype"]
    vmem_cap = _tpu_vmem_capacity()

    if seq_tile is None:
        seq_tile = _default_seq_tile(vmem_cap)
    tile, T_pad = _tile_and_pad(T, seq_tile)

    x_c = x.astype(compute_dtype)
    if T_pad != T:
        x_c = jnp.pad(x_c, ((0, 0), (0, T_pad - T), (0, 0)))

    # 1) Fused QKV projection (done ONCE per sequence; scale folded into Q).
    q, k, v = _qkv_projection(x_c, prepared, tile, vmem_cap)
    # 2) Flash attention over (B, q-tiles, kv-tiles); no weights resident.
    attn = _flash_attention(q, k, v, num_heads, head_dim, T, tile,
                            compute_dtype, vmem_cap)
    # 3) Output projection.
    out = _out_projection(attn, prepared, tile, x.dtype, vmem_cap)

    if T_pad != T:
        out = out[:, :T, :]
    return out


# ---------------------------------------------------------------------------
# Pure-JAX reference (mirrors the PyTorch forward: mask=None, eval mode)
# ---------------------------------------------------------------------------

def reference(x, params, num_heads):
    B, T, C = x.shape
    Dh = C // num_heads

    def linear(v, w, b):
        return v @ w.T + b

    q = linear(x, params["wq"], params["bq"]).reshape(B, T, num_heads, Dh).transpose(0, 2, 1, 3)
    k = linear(x, params["wk"], params["bk"]).reshape(B, T, num_heads, Dh).transpose(0, 2, 1, 3)
    v = linear(x, params["wv"], params["bv"]).reshape(B, T, num_heads, Dh).transpose(0, 2, 1, 3)

    scores = jnp.einsum("bhqd,bhkd->bhqk", q, k) / math.sqrt(Dh)
    attn = jax.nn.softmax(scores, axis=-1)
    out = jnp.einsum("bhqk,bhkd->bhqd", attn, v)
    out = out.transpose(0, 2, 1, 3).reshape(B, T, C)
    return linear(out, params["wo"], params["bo"])


if __name__ == "__main__":
    # Small shapes consistent with the module: B=2, T=8, embed_dim=32, heads=4.
    B, T, C, H = 2, 8, 32, 4

    key = jax.random.PRNGKey(0)
    keys = jax.random.split(key, 9)
    bound = 1.0 / math.sqrt(C)   # PyTorch nn.Linear default init range

    params = {
        "wq": jax.random.uniform(keys[0], (C, C), jnp.float32, -bound, bound),
        "bq": jax.random.uniform(keys[1], (C,),   jnp.float32, -bound, bound),
        "wk": jax.random.uniform(keys[2], (C, C), jnp.float32, -bound, bound),
        "bk": jax.random.uniform(keys[3], (C,),   jnp.float32, -bound, bound),
        "wv": jax.random.uniform(keys[4], (C, C), jnp.float32, -bound, bound),
        "bv": jax.random.uniform(keys[5], (C,),   jnp.float32, -bound, bound),
        "wo": jax.random.uniform(keys[6], (C, C), jnp.float32, -bound, bound),
        "bo": jax.random.uniform(keys[7], (C,),   jnp.float32, -bound, bound),
    }
    x = jax.random.normal(keys[8], (B, T, C), jnp.float32)

    ref = reference(x, params, num_heads=H)

    # --- f32-operand path: tight check against the pure-JAX reference. -----
    prep_f32 = prepare_params(params, num_heads=H, compute_dtype=jnp.float32)
    out_f32 = jax.block_until_ready(multi_head_self_attention(x, prep_f32, num_heads=H))
    assert out_f32.shape == (B, T, C)
    diff_f32 = float(jnp.max(jnp.abs(out_f32 - ref)))
    assert jnp.allclose(out_f32, ref, rtol=1e-2, atol=1e-2), \
        f"f32 path max abs diff = {diff_f32}"

    # --- bf16-operand path (fast MXU path on v6e/v7x); looser tolerance. ---
    prep_bf16 = prepare_params(params, num_heads=H, compute_dtype=jnp.bfloat16)
    out_bf16 = jax.block_until_ready(multi_head_self_attention(x, prep_bf16, num_heads=H))
    diff_bf16 = float(jnp.max(jnp.abs(out_bf16.astype(jnp.float32) - ref)))
    assert jnp.allclose(out_bf16.astype(jnp.float32), ref, rtol=1e-1, atol=1e-1), \
        f"bf16 path max abs diff = {diff_bf16}"

    print("KERNEL_OK")
</pallas_src>

<mosaic_0001>
module attributes {stable_mosaic.version = 11 : i64} {
  func.func @qkv_proj_kernel(%arg0: i32, %arg1: i32, %arg2: memref<1x8x32xf32, #tpu.memory_space<vmem>>, %arg3: memref<32x96xf32, #tpu.memory_space<vmem>>, %arg4: memref<1x96xf32, #tpu.memory_space<vmem>>, %arg5: memref<1x8x32xf32, #tpu.memory_space<vmem>>, %arg6: memref<1x8x32xf32, #tpu.memory_space<vmem>>, %arg7: memref<1x8x32xf32, #tpu.memory_space<vmem>>) attributes {dimension_semantics = [#tpu.dimension_semantics<parallel>, #tpu.dimension_semantics<parallel>], iteration_bounds = array<i64: 2, 1>, scalar_prefetch = 0 : i64, scratch_operands = 0 : i64, tpu.core_type = #tpu.core_type<tc>, window_params = [{transform_indices = @transform_0, window_bounds = array<i64: 1, 8, 32>}, {pipeline_mode = #tpu.pipeline_mode<synchronous>, transform_indices = @transform_1, window_bounds = array<i64: 32, 96>}, {pipeline_mode = #tpu.pipeline_mode<synchronous>, transform_indices = @transform_2, window_bounds = array<i64: 1, 96>}, {transform_indices = @transform_3, window_bounds = array<i64: 1, 8, 32>}, {transform_indices = @transform_4, window_bounds = array<i64: 1, 8, 32>}, {transform_indices = @transform_5, window_bounds = array<i64: 1, 8, 32>}]} {
    %c0 = arith.constant 0 : index
    %c0_0 = arith.constant 0 : index
    %c0_1 = arith.constant 0 : index
    %0 = vector.load %arg2[%c0, %c0_0, %c0_1] : memref<1x8x32xf32, #tpu.memory_space<vmem>>, vector<1x8x32xf32>
    %1 = vector.shape_cast %0 : vector<1x8x32xf32> to vector<8x32xf32>
    %c0_2 = arith.constant 0 : index
    %c0_3 = arith.constant 0 : index
    %2 = vector.load %arg3[%c0_2, %c0_3] : memref<32x96xf32, #tpu.memory_space<vmem>>, vector<32x96xf32>
    %cst = arith.constant dense<0.000000e+00> : vector<8x96xf32>
    %3 = tpu.matmul %1, %2, %cst {dimension_numbers = #tpu.dot_dimension_numbers<[1], [0], [0], [1], [0, 0, 1, 1], [], []>} : vector<8x32xf32>, vector<32x96xf32>, vector<8x96xf32> -> vector<8x96xf32>
    %c0_4 = arith.constant 0 : index
    %c0_5 = arith.constant 0 : index
    %4 = vector.load %arg4[%c0_4, %c0_5] : memref<1x96xf32, #tpu.memory_space<vmem>>, vector<1x96xf32>
    %5 = vector.broadcast %4 : vector<1x96xf32> to vector<8x96xf32>
    %6 = arith.addf %3, %5 : vector<8x96xf32>
    %7 = vector.extract_strided_slice %6 {offsets = [0, 0], sizes = [8, 32], strides = [1, 1]} : vector<8x96xf32> to vector<8x32xf32>
    %c0_6 = arith.constant 0 : index
    %c0_7 = arith.constant 0 : index
    %c0_8 = arith.constant 0 : index
    %8 = vector.load %arg5[%c0_6, %c0_7, %c0_8] : memref<1x8x32xf32, #tpu.memory_space<vmem>>, vector<1x8x32xf32>
    %9 = vector.shape_cast %8 : vector<1x8x32xf32> to vector<8x32xf32>
    %10 = vector.shape_cast %7 : vector<8x32xf32> to vector<1x8x32xf32>
    tpu.vector_store %arg5[%c0_6, %c0_7, %c0_8], %10 {strides = array<i32>} : memref<1x8x32xf32, #tpu.memory_space<vmem>>, vector<1x8x32xf32>,
    %11 = vector.extract_strided_slice %6 {offsets = [0, 32], sizes = [8, 32], strides = [1, 1]} : vector<8x96xf32> to vector<8x32xf32>
    %c0_9 = arith.constant 0 : index
    %c0_10 = arith.constant 0 : index
    %c0_11 = arith.constant 0 : index
    %12 = vector.load %arg6[%c0_9, %c0_10, %c0_11] : memref<1x8x32xf32, #tpu.memory_space<vmem>>, vector<1x8x32xf32>
    %13 = vector.shape_cast %12 : vector<1x8x32xf32> to vector<8x32xf32>
    %14 = vector.shape_cast %11 : vector<8x32xf32> to vector<1x8x32xf32>
    tpu.vector_store %arg6[%c0_9, %c0_10, %c0_11], %14 {strides = array<i32>} : memref<1x8x32xf32, #tpu.memory_space<vmem>>, vector<1x8x32xf32>,
    %15 = vector.extract_strided_slice %6 {offsets = [0, 64], sizes = [8, 32], strides = [1, 1]} : vector<8x96xf32> to vector<8x32xf32>
    %c0_12 = arith.constant 0 : index
    %c0_13 = arith.constant 0 : index
    %c0_14 = arith.constant 0 : index
    %16 = vector.load %arg7[%c0_12, %c0_13, %c0_14] : memref<1x8x32xf32, #tpu.memory_space<vmem>>, vector<1x8x32xf32>
    %17 = vector.shape_cast %16 : vector<1x8x32xf32> to vector<8x32xf32>
    %18 = vector.shape_cast %15 : vector<8x32xf32> to vector<1x8x32xf32>
    tpu.vector_store %arg7[%c0_12, %c0_13, %c0_14], %18 {strides = array<i32>} : memref<1x8x32xf32, #tpu.memory_space<vmem>>, vector<1x8x32xf32>,
    return
  }
  func.func @transform_0(%arg0: i32, %arg1: i32) -> (i32, i32, i32) {
    %c0_i32 = arith.constant 0 : i32
    %c0_i32_0 = arith.constant 0 : i32
    return %arg0, %arg1, %c0_i32 : i32, i32, i32
  }
  func.func @transform_1(%arg0: i32, %arg1: i32) -> (i32, i32) {
    %c0_i32 = arith.constant 0 : i32
    %c0_i32_0 = arith.constant 0 : i32
    %c0_i32_1 = arith.constant 0 : i32
    return %c0_i32, %c0_i32_0 : i32, i32
  }
  func.func @transform_2(%arg0: i32, %arg1: i32) -> (i32, i32) {
    %c0_i32 = arith.constant 0 : i32
    %c0_i32_0 = arith.constant 0 : i32
    %c0_i32_1 = arith.constant 0 : i32
    return %c0_i32, %c0_i32_0 : i32, i32
  }
  func.func @transform_3(%arg0: i32, %arg1: i32) -> (i32, i32, i32) {
    %c0_i32 = arith.constant 0 : i32
    %c0_i32_0 = arith.constant 0 : i32
    return %arg0, %arg1, %c0_i32 : i32, i32, i32
  }
  func.func @transform_4(%arg0: i32, %arg1: i32) -> (i32, i32, i32) {
    %c0_i32 = arith.constant 0 : i32
    %c0_i32_0 = arith.constant 0 : i32
    return %arg0, %arg1, %c0_i32 : i32, i32, i32
  }
  func.func @transform_5(%arg0: i32, %arg1: i32) -> (i32, i32, i32) {
    %c0_i32 = arith.constant 0 : i32
    %c0_i32_0 = arith.constant 0 : i32
    return %arg0, %arg1, %c0_i32 : i32, i32, i32
  }
}

</mosaic_0001>

<llo_original>
// kernel: tpu_custom_call.1
$region0: #{tpu_custom_call.1}
  #allocation0 [shape = 'u32[]', space=smem, size = 0x4, offset = 0x4, fixed_abs, tag = 'smem constant byte address 0x4 - core index']
  #allocation1 [shape = 'u32[144,128]{1,0:T(1,128)}', space=vmem, size = 0x12000, scoped, tag = 'internal scratch']
  %s0 = inlined_call_operand.hbm [shape: f32[2,8,32], index: 0, kind: input, shape index: {}]
  %s1 = inlined_call_operand.hbm [shape: f32[32,96], index: 1, kind: input, shape index: {}]
  %s2 = inlined_call_operand.vmem [shape: f32[1,96], index: 2, kind: input, shape index: {}]
  %s3 = inlined_call_operand.hbm [shape: f32[2,8,32], index: 3, kind: output, shape index: {0}]
  %s4 = inlined_call_operand.hbm [shape: f32[2,8,32], index: 4, kind: output, shape index: {1}]
  %s5 = inlined_call_operand.hbm [shape: f32[2,8,32], index: 5, kind: output, shape index: {2}]
  %6 = xla_tuple %s3, %s4, %s5
  %s7 = sld [smem:[#allocation0]]
  $region69: #{tpu_custom_call.1} parent=0
    _
  %s9 = ssub.s32 1, %s7
  %s10 = scalar_select 0, %s9, %s7
  $region1: #{tpu_custom_call.1} parent=0
    #allocation2 [shape = 'u8[8192]{0}', space=vmem, size = 0x2000, scoped, tag = 'input window, operand 0']
    #allocation3 [shape = 's32[2]{0}', space=sflag, size = 0x8, scoped, tag = 'scoped memory for tpu_custom_call.1']
    #allocation4 [shape = 's32[2]{0}', space=sflag, size = 0x8, scoped, tag = 'scoped memory for tpu_custom_call.1']
    #allocation5 [shape = 'u8[16384]{0}', space=vmem, size = 0x4000, scoped, tag = 'input window, operand 1, single buffered']
    #allocation6 [shape = 's32[1]{0}', space=sflag, size = 0x4, scoped, tag = 'scoped memory for tpu_custom_call.1']
    #allocation7 [shape = 'u8[8192]{0}', space=vmem, size = 0x2000, scoped, tag = 'output window, operand 0']
    #allocation8 [shape = 'u8[8192]{0}', space=vmem, size = 0x2000, scoped, tag = 'output window, operand 1']
    #allocation9 [shape = 's32[2]{0}', space=sflag, size = 0x8, scoped, tag = 'scoped memory for tpu_custom_call.1']
    #allocation10 [shape = 'u8[8192]{0}', space=vmem, size = 0x2000, scoped, tag = 'output window, operand 2']
    %11 = vsyncpa [#allocation3], 0
    %s12 = scalar_lea.sflag [#allocation3], 1
    %13 = vsyncpa %s12, 0
    %14 = vsyncpa [#allocation6], 0
    %15 = vsyncpa [#allocation4], 0
    %s16 = scalar_lea.sflag [#allocation4], 1
    %17 = vsyncpa %s16, 0
    %18 = vsyncpa [#allocation9], 0
    %s19 = scalar_lea.sflag [#allocation9], 1
    %20 = vsyncpa %s19, 0
    loop: start=0, step=1, limit=4
    $region2: #{tpu_custom_call.1} parent=1 // loop_pre_header
      _
    $region3: #{tpu_custom_call.1} parent=1 // loop_header
      %s22 = sphi 0, %s26
      %p23 = scmp.ge.s32.totalorder %s22, 4
      %s29 = sphi 0, %s41
      %s30 = sphi 0, %s37
      %s31 = sphi 0, %s29
      %s32 = sphi 0, %s30
      %s33 = sphi 0, %s31
      %s34 = sphi 0, %s32
      %s46 = sphi 0, %s48
      %s49 = sphi 0, %s46
      %s50 = sphi 0, %s49
      %s66 = sphi 0, %s50
      %s70 = sphi 0, %s70
      %s72 = sphi 0, %s70
      %s73 = sphi 0, %s72
      %s87 = sphi 0, %s73
      %s91 = sphi 0, %s91
      %s93 = sphi 0, %s91
      %s94 = sphi 0, %s93
      %s108 = sphi 0, %s94
      %s116 = sphi 0, %s118
      %s119 = sphi 0, %s116
      %s120 = sphi 0, %s119
      %s136 = sphi 0, %s120
      %s144 = sphi 0, %s146
      %s147 = sphi 0, %s144
      %s148 = sphi 0, %s147
      %s164 = sphi 0, %s148
      %s172 = sphi 0, %s174
      %s175 = sphi 0, %s172
      %s176 = sphi 0, %s175
      %s192 = sphi 0, %s176
    $region4: #{tpu_custom_call.1} parent=1 // loop_header_branch
      %25 = sbr.rel (%p23) target = $region8
    $region5: #{tpu_custom_call.1} parent=1 // loop_body
      %s27 = ssub.s32 %s22, 1
      %s28 = ssub.s32 %s22, 2
      %s35 = sadd.s32 1, %s30
      %p36 = scmp.ge.s32.totalorder %s35, 1
      %s37 = scalar_select %p36, 0, %s35
      %s38 = sadd.s32 1, %s29
      %s39 = scalar_select %p36, %s38, %s29
      %p40 = scmp.ge.s32.totalorder %s39, 2
      %s41 = scalar_select %p40, 0, %s39
      %s42 = ssub.s32 %s29, %s41
      %s43 = ssub.s32 %s30, %s37
      %s44 = sor.u32 %s42, %s43
      %p45 = scmp.eq.s32.totalorder %s44, 0
      %s47 = sadd.s32 %s46, 1
      %s48 = scalar_select %p45, %s46, %s47
      %p51 = pneg %p45
      %p52 = scmp.eq.s32.totalorder %s22, 1
      %p53 = por %p51, %p52
      %p54 = scmp.ne.s32.totalorder %s46, %s49
      %p55 = scmp.eq.s32.totalorder %s22, 0
      %p56 = por %p54, %p55
      %p57 = scmp.ne.s32.totalorder %s46, %s49
      %p58 = scmp.eq.s32.totalorder %s27, 1
      %p59 = por %p57, %p58
      %p60 = scmp.ne.s32.totalorder %s49, %s50
      %p61 = scmp.eq.s32.totalorder %s27, 0
      %p62 = por %p60, %p61
      %p63 = scmp.ne.s32.totalorder %s49, %s50
      %p64 = scmp.eq.s32.totalorder %s28, 1
      %p65 = por %p63, %p64
      %p67 = scmp.ne.s32.totalorder %s50, %s66
      %p68 = scmp.eq.s32.totalorder %s28, 0
      %p69 = por %p67, %p68
      %s71 = sadd.s32 %s70, 1
      %p74 = scmp.eq.s32.totalorder %s22, 1
      %p75 = scmp.ne.s32.totalorder %s70, %s72
      %p76 = scmp.eq.s32.totalorder %s22, 0
      %p77 = por %p75, %p76
      %p78 = scmp.ne.s32.totalorder %s70, %s72
      %p79 = scmp.eq.s32.totalorder %s27, 1
      %p80 = por %p78, %p79
      %p81 = scmp.ne.s32.totalorder %s72, %s73
      %p82 = scmp.eq.s32.totalorder %s27, 0
      %p83 = por %p81, %p82
      %p84 = scmp.ne.s32.totalorder %s72, %s73
      %p85 = scmp.eq.s32.totalorder %s28, 1
      %p86 = por %p84, %p85
      %p88 = scmp.ne.s32.totalorder %s73, %s87
      %p89 = scmp.eq.s32.totalorder %s28, 0
      %p90 = por %p88, %p89
      %s92 = sadd.s32 %s91, 1
      %p95 = scmp.eq.s32.totalorder %s22, 1
      %p96 = scmp.ne.s32.totalorder %s91, %s93
      %p97 = scmp.eq.s32.totalorder %s22, 0
      %p98 = por %p96, %p97
      %p99 = scmp.ne.s32.totalorder %s91, %s93
      %p100 = scmp.eq.s32.totalorder %s27, 1
      %p101 = por %p99, %p100
      %p102 = scmp.ne.s32.totalorder %s93, %s94
      %p103 = scmp.eq.s32.totalorder %s27, 0
      %p104 = por %p102, %p103
      %p105 = scmp.ne.s32.totalorder %s93, %s94
      %p106 = scmp.eq.s32.totalorder %s28, 1
      %p107 = por %p105, %p106
      %p109 = scmp.ne.s32.totalorder %s94, %s108
      %p110 = scmp.eq.s32.totalorder %s28, 0
      %p111 = por %p109, %p110
      %s112 = ssub.s32 %s29, %s41
      %s113 = ssub.s32 %s30, %s37
      %s114 = sor.u32 %s112, %s113
      %p115 = scmp.eq.s32.totalorder %s114, 0
      %s117 = sadd.s32 %s116, 1
      %s118 = scalar_select %p115, %s116, %s117
      %p121 = pneg %p115
      %p122 = scmp.eq.s32.totalorder %s22, 1
      %p123 = por %p121, %p122
      %p124 = scmp.ne.s32.totalorder %s116, %s119
      %p125 = scmp.eq.s32.totalorder %s22, 0
      %p126 = por %p124, %p125
      %p127 = scmp.ne.s32.totalorder %s116, %s119
      %p128 = scmp.eq.s32.totalorder %s27, 1
      %p129 = por %p127, %p128
      %p130 = scmp.ne.s32.totalorder %s119, %s120
      %p131 = scmp.eq.s32.totalorder %s27, 0
      %p132 = por %p130, %p131
      %p133 = scmp.ne.s32.totalorder %s119, %s120
      %p134 = scmp.eq.s32.totalorder %s28, 1
      %p135 = por %p133, %p134
      %p137 = scmp.ne.s32.totalorder %s120, %s136
      %p138 = scmp.eq.s32.totalorder %s28, 0
      %p139 = por %p137, %p138
      %s140 = ssub.s32 %s29, %s41
      %s141 = ssub.s32 %s30, %s37
      %s142 = sor.u32 %s140, %s141
      %p143 = scmp.eq.s32.totalorder %s142, 0
      %s145 = sadd.s32 %s144, 1
      %s146 = scalar_select %p143, %s144, %s145
      %p149 = pneg %p143
      %p150 = scmp.eq.s32.totalorder %s22, 1
      %p151 = por %p149, %p150
      %p152 = scmp.ne.s32.totalorder %s144, %s147
      %p153 = scmp.eq.s32.totalorder %s22, 0
      %p154 = por %p152, %p153
      %p155 = scmp.ne.s32.totalorder %s144, %s147
      %p156 = scmp.eq.s32.totalorder %s27, 1
      %p157 = por %p155, %p156
      %p158 = scmp.ne.s32.totalorder %s147, %s148
      %p159 = scmp.eq.s32.totalorder %s27, 0
      %p160 = por %p158, %p159
      %p161 = scmp.ne.s32.totalorder %s147, %s148
      %p162 = scmp.eq.s32.totalorder %s28, 1
      %p163 = por %p161, %p162
      %p165 = scmp.ne.s32.totalorder %s148, %s164
      %p166 = scmp.eq.s32.totalorder %s28, 0
      %p167 = por %p165, %p166
      %s168 = ssub.s32 %s29, %s41
      %s169 = ssub.s32 %s30, %s37
      %s170 = sor.u32 %s168, %s169
      %p171 = scmp.eq.s32.totalorder %s170, 0
      %s173 = sadd.s32 %s172, 1
      %s174 = scalar_select %p171, %s172, %s173
      %p177 = pneg %p171
      %p178 = scmp.eq.s32.totalorder %s22, 1
      %p179 = por %p177, %p178
      %p180 = scmp.ne.s32.totalorder %s172, %s175
      %p181 = scmp.eq.s32.totalorder %s22, 0
      %p182 = por %p180, %p181
      %p183 = scmp.ne.s32.totalorder %s172, %s175
      %p184 = scmp.eq.s32.totalorder %s27, 1
      %p185 = por %p183, %p184
      %p186 = scmp.ne.s32.totalorder %s175, %s176
      %p187 = scmp.eq.s32.totalorder %s27, 0
      %p188 = por %p186, %p187
      %p189 = scmp.ne.s32.totalorder %s175, %s176
      %p190 = scmp.eq.s32.totalorder %s28, 1
      %p191 = por %p189, %p190
      %p193 = scmp.ne.s32.totalorder %s176, %s192
      %p194 = scmp.eq.s32.totalorder %s28, 0
      %p195 = por %p193, %p194
      %p196 = scmp.le.s32.totalorder 1, %s22
      %p197 = scmp.lt.s32.totalorder %s22, 3
      %p198 = pnand %p196, %p197
      %p199 = pneg %p198
      // Predicated region
      $region9: #{tpu_custom_call.1} parent=5 // pred_check
        _
      $region10: #{tpu_custom_call.1} parent=5 // pred_check_branch
        %201 = sbr.rel (%p198) target = $region12
      $region11: #{tpu_custom_call.1} parent=5 // pred_region
        %s202 = ssub.s32 %s22, 1
        // Predicated region
        $region13: #{tpu_custom_call.1} parent=11 // pred_check
          %p203 = pneg %p83
        $region14: #{tpu_custom_call.1} parent=11 // pred_check_branch
          %205 = sbr.rel (%p203) target = $region16
        $region15: #{tpu_custom_call.1} parent=11 // pred_region
          %s207 = ssub.s32 512, 512
          %208 = vsyncadd [#allocation6], %s207
          %s209 = sshll.u32 [#allocation5], 4
          %s210 = int_to_ptr.vmem [resolvable:$true] %s209
          %215 = dma.hbm_to_vmem [thread:$0]  %s1, 512, %s210, [#allocation6], 128, 128, 8
        $region16: #{tpu_custom_call.1} parent=11 // pred_fallthru
          _
        // Predicated region
        $region17: #{tpu_custom_call.1} parent=11 // pred_check
          %p216 = pneg %p104
        $region18: #{tpu_custom_call.1} parent=11 // pred_check_branch
          %218 = sbr.rel (%p216) target = $region20
        $region19: #{tpu_custom_call.1} parent=11 // pred_region
          _
        $region20: #{tpu_custom_call.1} parent=11 // pred_fallthru
          _
      $region12: #{tpu_custom_call.1} parent=5 // pred_fallthru
        _
      %p219 = scmp.lt.s32.totalorder %s22, 2
      // Predicated region
      $region21: #{tpu_custom_call.1} parent=5 // pred_check
        %p220 = pneg %p219
      $region22: #{tpu_custom_call.1} parent=5 // pred_check_branch
        %222 = sbr.rel (%p220) target = $region24
      $region23: #{tpu_custom_call.1} parent=5 // pred_region
        // Predicated region
        $region25: #{tpu_custom_call.1} parent=23 // pred_check
          %p223 = pneg %p56
        $region26: #{tpu_custom_call.1} parent=23 // pred_check_branch
          %225 = sbr.rel (%p223) target = $region28
        $region27: #{tpu_custom_call.1} parent=23 // pred_region
          %s226 = sand.u32 %s46, 1
          %s227 = scalar_lea.sflag [#allocation3], %s226
          %s228 = sand.u32 %s46, 1
          %s229 = smul.addr %s228, 8
          %s230 = scalar_lea.vmem [#allocation2], %s229
          %s232 = ssub.s32 128, 128
          %233 = vsyncadd %s227, %s232
          %s234 = sadd.s32 %s30, %s29
          %s235 = smul.addr %s234, 128
          %s236 = scalar_lea.hbm %s0, %s235
          %s238 = sshll.u32 %s230, 4
          %s239 = int_to_ptr.vmem [resolvable:$true] %s238
          %241 = dma.hbm_to_vmem [thread:$0]  %s236, 128, %s239, %s227
        $region28: #{tpu_custom_call.1} parent=23 // pred_fallthru
          _
      $region24: #{tpu_custom_call.1} parent=5 // pred_fallthru
        _
      %p242 = scmp.le.s32.totalorder 1, %s22
      %p243 = scmp.lt.s32.totalorder %s22, 3
      %p244 = pnand %p242, %p243
      %p245 = pneg %p244
      // Predicated region
      $region29: #{tpu_custom_call.1} parent=5 // pred_check
        _
      $region30: #{tpu_custom_call.1} parent=5 // pred_check_branch
        %247 = sbr.rel (%p244) target = $region32
      $region31: #{tpu_custom_call.1} parent=5 // pred_region
        %s248 = ssub.s32 %s22, 1
        %s249 = sand.u32 %s49, 1
        %s250 = scalar_lea.sflag [#allocation3], %s249
        %s251 = sand.u32 %s49, 1
        %s252 = smul.addr %s251, 8
        %s253 = scalar_lea.vmem [#allocation2], %s252
        // Predicated region
        $region33: #{tpu_custom_call.1} parent=31 // pred_check
          %p254 = pneg %p62
        $region34: #{tpu_custom_call.1} parent=31 // pred_check_branch
          %256 = sbr.rel (%p254) target = $region36
        $region35: #{tpu_custom_call.1} parent=31 // pred_region
          %257 = dma.done %s250, 128
        $region36: #{tpu_custom_call.1} parent=31 // pred_fallthru
          _
        // Predicated region
        $region37: #{tpu_custom_call.1} parent=31 // pred_check
          %p258 = pneg %p83
        $region38: #{tpu_custom_call.1} parent=31 // pred_check_branch
          %260 = sbr.rel (%p258) target = $region40
        $region39: #{tpu_custom_call.1} parent=31 // pred_region
          %261 = dma.done [#allocation6], 512
        $region40: #{tpu_custom_call.1} parent=31 // pred_fallthru
          _
        %s262 = sand.u32 %s49, 1
        %s263 = scalar_lea.sflag [#allocation3], %s262
        %s264 = sand.u32 %s49, 1
        %s265 = smul.addr %s264, 8
        %s266 = scalar_lea.vmem [#allocation2], %s265
        %p267 = pneg %p62
        %p268 = pneg %p59
        %p269 = pneg %p83
        %p270 = pneg %p80
        %p271 = pneg %p104
        %p272 = pneg %p101
        %p273 = pneg %p132
        %p274 = pneg %p129
        %s275 = sand.u32 %s119, 1
        %s276 = scalar_lea.sflag [#allocation4], %s275
        %s277 = sand.u32 %s119, 1
        %s278 = smul.addr %s277, 8
        %s279 = scalar_lea.vmem [#allocation7], %s278
        %p280 = pneg %p160
        %p281 = pneg %p157
        %s282 = sand.u32 %s27, 1
        %s283 = scalar_lea.sflag [#allocation9], %s282
        %s284 = sand.u32 %s147, 1
        %s285 = smul.addr %s284, 8
        %s286 = scalar_lea.vmem [#allocation8], %s285
        %p287 = pneg %p188
        %p288 = pneg %p185
        %s289 = sand.u32 %s27, 1
        %s290 = scalar_lea.sflag [#allocation9], %s289
        %s291 = sand.u32 %s175, 1
        %s292 = smul.addr %s291, 8
        %s293 = scalar_lea.vmem [#allocation10], %s292
        %v294 = vld [vmem:[%s253] sm:$0xff]
        %v295 = vld [vmem:[#allocation5] sm:$0xff]
        %v296 = vld [vmem:[#allocation5 + $0x8] sm:$0xff]
        %v297 = vld [vmem:[#allocation5 + $0x10] sm:$0xff]
        %v298 = vld [vmem:[#allocation5 + $0x18] sm:$0xff]
        %v299 = vld [vmem:[%s2] sm:$0x1]
        %v301 = vlaneseq
        %v302 = vshrl.u32 %v301, 7
        %v303 = vsub.s32 0, %v302
        %v304 = vrot.slane %v299, %v303
        %vm306 = vcmask 261120
        %v308 = vsel %vm306, %v294, 0
        %310 = vmatprep.subr.mxu0 0.0
        %311 = vmatpush1.msra.mxu0 0.0
        %312 = vmatprep.subr.mxu0 0.0
        %313 = vmatpush1.msra.mxu0 0.0
        %314 = vmatprep.subr.mxu0 0.0
        %315 = vmatpush1.msra.mxu0 0.0
        %316 = vmatprep.subr.mxu0 0.0
        %317 = vmatpush1.msra.mxu0 0.0
        %318 = vmatprep.subr.mxu0 0.0
        %319 = vmatpush1.msra.mxu0 0.0
        %320 = vmatprep.subr.mxu0 0.0
        %321 = vmatpush1.msra.mxu0 0.0
        %322 = vmatprep.subr.mxu0 0.0
        %323 = vmatpush1.msra.mxu0 0.0
        %324 = vmatprep.subr.mxu0 0.0
        %325 = vmatpush1.msra.mxu0 0.0
        %326 = vmatprep.subr.mxu0 0.0
        %327 = vmatpush1.msra.mxu0 0.0
        %328 = vmatprep.subr.mxu0 0.0
        %329 = vmatpush1.msra.mxu0 0.0
        %330 = vmatprep.subr.mxu0 0.0
        %331 = vmatpush1.msra.mxu0 0.0
        %332 = vmatprep.subr.mxu0 0.0
        %333 = vmatpush1.msra.mxu0 0.0
        %334 = vmatprep.subr.mxu0 0.0
        %335 = vmatpush1.msra.mxu0 %v298
        %336 = vmatprep.subr.mxu0 0.0
        %337 = vmatpush1.msra.mxu0 %v297
        %338 = vmatprep.subr.mxu0 0.0
        %339 = vmatpush1.msra.mxu0 %v296
        %340 = vmatprep.subr.mxu0 0.0
        %341 = vmatpush1.msra.mxu0 %v295
        %342 = vmatprep.subr.mxu0 0.0
        %343 = vmatpush2.msra.mxu0 0.0
        %344 = vmatprep.subr.mxu0 0.0
        %345 = vmatpush2.msra.mxu0 0.0
        %346 = vmatprep.subr.mxu0 0.0
        %347 = vmatpush2.msra.mxu0 0.0
        %348 = vmatprep.subr.mxu0 0.0
        %349 = vmatpush2.msra.mxu0 0.0
        %350 = vmatprep.subr.mxu0 0.0
        %351 = vmatpush2.msra.mxu0 0.0
        %352 = vmatprep.subr.mxu0 0.0
        %353 = vmatpush2.msra.mxu0 0.0
        %354 = vmatprep.subr.mxu0 0.0
        %355 = vmatpush2.msra.mxu0 0.0
        %356 = vmatprep.subr.mxu0 0.0
        %357 = vmatpush2.msra.mxu0 0.0
        %358 = vmatprep.subr.mxu0 0.0
        %359 = vmatpush2.msra.mxu0 0.0
        %360 = vmatprep.subr.mxu0 0.0
        %361 = vmatpush2.msra.mxu0 0.0
        %362 = vmatprep.subr.mxu0 0.0
        %363 = vmatpush2.msra.mxu0 0.0
        %364 = vmatprep.subr.mxu0 0.0
        %365 = vmatpush2.msra.mxu0 0.0
        %366 = vmatprep.subr.mxu0 0.0
        %367 = vmatpush2.msra.mxu0 0.0
        %368 = vmatprep.subr.mxu0 0.0
        %369 = vmatpush2.msra.mxu0 0.0
        %370 = vmatprep.subr.mxu0 0.0
        %371 = vmatpush2.msra.mxu0 0.0
        %372 = vmatprep.subr.mxu0 0.0
        %373 = vmatpush2.msra.mxu0 0.0
        %374 = vmatprep.mubr.f32.mxu0 0.0
        %375 = vmatmul.mubr.f32.gmra.mxu0 %v308
        %v376 = vpop.f32.mrf.mxu0
        %v377 = vadd.f32 %v304, %v376
        %v378 = vpop.f32.mrf.mxu0
        %379 = vdwg.mxu0
        %380 = vst.msk [vmem:[%s279] sm:$0xff] %vm306, %v377
        %382 = vrot.lane.b32.xlu0 %v377, 96
        %v383 = vpop.permute.xlu0 %382
        %385 = vst.msk [vmem:[%s286] sm:$0xff] %vm306, %v383
        %386 = vrot.lane.b32.xlu0 %v377, 64
        %v387 = vpop.permute.xlu0 %386
        %389 = vst.msk [vmem:[%s293] sm:$0xff] %vm306, %v387
        %s390 = sand.u32 %s119, 1
        %s391 = scalar_lea.sflag [#allocation4], %s390
        %s392 = sand.u32 %s119, 1
        %s393 = smul.addr %s392, 8
        %s394 = scalar_lea.vmem [#allocation7], %s393
        %s395 = sand.u32 %s27, 1
        %s396 = scalar_lea.sflag [#allocation9], %s395
        %s397 = sand.u32 %s147, 1
        %s398 = smul.addr %s397, 8
        %s399 = scalar_lea.vmem [#allocation8], %s398
        %s400 = sand.u32 %s27, 1
        %s401 = scalar_lea.sflag [#allocation9], %s400
        %s402 = sand.u32 %s175, 1
        %s403 = smul.addr %s402, 8
        %s404 = scalar_lea.vmem [#allocation10], %s403
        // Predicated region
        $region41: #{tpu_custom_call.1} parent=31 // pred_check
          %p405 = pneg %p129
        $region42: #{tpu_custom_call.1} parent=31 // pred_check_branch
          %407 = sbr.rel (%p405) target = $region44
        $region43: #{tpu_custom_call.1} parent=31 // pred_region
          %s409 = ssub.s32 128, 128
          %410 = vsyncadd %s391, %s409
          %s411 = sadd.s32 %s32, %s31
          %s412 = smul.addr %s411, 128
          %s413 = scalar_lea.hbm %s3, %s412
          %s415 = sshll.u32 %s394, 4
          %s416 = int_to_ptr.vmem [resolvable:$true] %s415
          %418 = dma.vmem_to_hbm [thread:$0]  %s416, 128, %s413, %s391
        $region44: #{tpu_custom_call.1} parent=31 // pred_fallthru
          _
        // Predicated region
        $region45: #{tpu_custom_call.1} parent=31 // pred_check
          %p419 = pneg %p157
        $region46: #{tpu_custom_call.1} parent=31 // pred_check_branch
          %421 = sbr.rel (%p419) target = $region48
        $region47: #{tpu_custom_call.1} parent=31 // pred_region
          %s423 = ssub.s32 128, 128
          %424 = vsyncadd %s396, %s423
          %s425 = sadd.s32 %s32, %s31
          %s426 = smul.addr %s425, 128
          %s427 = scalar_lea.hbm %s4, %s426
          %s429 = sshll.u32 %s399, 4
          %s430 = int_to_ptr.vmem [resolvable:$true] %s429
          %432 = dma.vmem_to_hbm [thread:$0]  %s430, 128, %s427, %s396
        $region48: #{tpu_custom_call.1} parent=31 // pred_fallthru
          _
        // Predicated region
        $region49: #{tpu_custom_call.1} parent=31 // pred_check
          %p433 = pneg %p185
        $region50: #{tpu_custom_call.1} parent=31 // pred_check_branch
          %435 = sbr.rel (%p433) target = $region52
        $region51: #{tpu_custom_call.1} parent=31 // pred_region
          %s437 = ssub.s32 128, 128
          %438 = vsyncadd %s401, %s437
          %s439 = sadd.s32 %s32, %s31
          %s440 = smul.addr %s439, 128
          %s441 = scalar_lea.hbm %s5, %s440
          %s443 = sshll.u32 %s404, 4
          %s444 = int_to_ptr.vmem [resolvable:$true] %s443
          %446 = dma.vmem_to_hbm [thread:$0]  %s444, 128, %s441, %s401
        $region52: #{tpu_custom_call.1} parent=31 // pred_fallthru
          _
      $region32: #{tpu_custom_call.1} parent=5 // pred_fallthru
        _
      %p447 = scmp.le.s32.totalorder 2, %s22
      // Predicated region
      $region53: #{tpu_custom_call.1} parent=5 // pred_check
        %p448 = pneg %p447
      $region54: #{tpu_custom_call.1} parent=5 // pred_check_branch
        %450 = sbr.rel (%p448) target = $region56
      $region55: #{tpu_custom_call.1} parent=5 // pred_region
        %s451 = ssub.s32 %s22, 2
        // Predicated region
        $region57: #{tpu_custom_call.1} parent=55 // pred_check
          %p452 = pneg %p135
        $region58: #{tpu_custom_call.1} parent=55 // pred_check_branch
          %454 = sbr.rel (%p452) target = $region60
        $region59: #{tpu_custom_call.1} parent=55 // pred_region
          %s455 = sand.u32 %s120, 1
          %s456 = scalar_lea.sflag [#allocation4], %s455
          %s457 = sand.u32 %s120, 1
          %s458 = smul.addr %s457, 8
          %s459 = scalar_lea.vmem [#allocation7], %s458
          %460 = dma.done %s456, 128
        $region60: #{tpu_custom_call.1} parent=55 // pred_fallthru
          _
        // Predicated region
        $region61: #{tpu_custom_call.1} parent=55 // pred_check
          %p461 = pneg %p163
        $region62: #{tpu_custom_call.1} parent=55 // pred_check_branch
          %463 = sbr.rel (%p461) target = $region64
        $region63: #{tpu_custom_call.1} parent=55 // pred_region
          %s464 = sand.u32 %s28, 1
          %s465 = scalar_lea.sflag [#allocation9], %s464
          %s466 = sand.u32 %s148, 1
          %s467 = smul.addr %s466, 8
          %s468 = scalar_lea.vmem [#allocation8], %s467
          %469 = dma.done %s465, 128
        $region64: #{tpu_custom_call.1} parent=55 // pred_fallthru
          _
        // Predicated region
        $region65: #{tpu_custom_call.1} parent=55 // pred_check
          %p470 = pneg %p191
        $region66: #{tpu_custom_call.1} parent=55 // pred_check_branch
          %472 = sbr.rel (%p470) target = $region68
        $region67: #{tpu_custom_call.1} parent=55 // pred_region
          %s473 = sand.u32 %s28, 1
          %s474 = scalar_lea.sflag [#allocation9], %s473
          %s475 = sand.u32 %s176, 1
          %s476 = smul.addr %s475, 8
          %s477 = scalar_lea.vmem [#allocation10], %s476
          %478 = dma.done %s474, 128
        $region68: #{tpu_custom_call.1} parent=55 // pred_fallthru
          _
      $region56: #{tpu_custom_call.1} parent=5 // pred_fallthru
        _
    $region6: #{tpu_custom_call.1} parent=1 // loop_footer
      %s26 = sadd.s32 1, %s22
    $region7: #{tpu_custom_call.1} parent=1 // loop_footer_branch
      %21 = sbr.rel target = $region3
    $region8: #{tpu_custom_call.1} parent=1 // loop_exit
      _
    %479 = vsyncpa [#allocation3], 1
    %s480 = scalar_lea.sflag [#allocation3], 1
    %481 = vsyncpa %s480, 1
    %482 = vsyncpa [#allocation6], 1
    %483 = vsyncpa [#allocation4], 1
    %s484 = scalar_lea.sflag [#allocation4], 1
    %485 = vsyncpa %s484, 1
    %486 = vsyncpa [#allocation9], 1
    %s487 = scalar_lea.sflag [#allocation9], 1
    %488 = vsyncpa %s487, 1

</llo_original>
